<compile_context>
chip_gen: v7x
topology: tpu7x:2x2x1
jax: 0.10.0
libtpu: 0.0.40
codegen_flags: <defaults>
</compile_context>

<pallas_src>
import jax
import jax.numpy as jnp
from jax.experimental import pallas as pl
from jax.experimental.pallas import tpu as pltpu

LANES = 128
MAX_TILE_ROWS = 1024  # 1024 x 128 f32 = 512 KiB per input block


def _abs_diff_f32(pred_ref, target_ref):
    # Keep the elementwise math in f32 (v5e has no bf16 VPU path; this is free
    # under the memory bound on all chips).
    return jnp.abs(pred_ref[...].astype(jnp.float32)
                   - target_ref[...].astype(jnp.float32))


def _mae_single_block_kernel(pred_ref, target_ref, out_ref):
    # Whole problem in one VMEM block: one reduce, one store, no grid carry.
    out_ref[...] = jnp.sum(_abs_diff_f32(pred_ref, target_ref), keepdims=True)


def _make_tiled_kernel(block_rows, total_rows):
    mask_tail = (total_rows % block_rows) != 0  # static at trace time

    def kernel(pred_ref, target_ref, out_ref, acc_ref):
        i = pl.program_id(0)

        @pl.when(i == 0)
        def _init():
            acc_ref[...] = jnp.zeros_like(acc_ref)

        diff = _abs_diff_f32(pred_ref, target_ref)
        if mask_tail:
            # The edge block of a non-divisible grid reads unspecified values;
            # mask rows past the logical end (pure VPU work, hidden under DMA).
            row = (i * block_rows
                   + jax.lax.broadcasted_iota(jnp.int32, diff.shape, 0))
            diff = jnp.where(row < total_rows, diff, 0.0)

        # Block-shaped elementwise accumulate: no per-step cross-lane (XLU)
        # reduce and no serial (1,1) scalar read-modify-write on the hot path.
        acc_ref[...] += diff

        @pl.when(i == pl.num_programs(0) - 1)
        def _finalize():
            # Pay the expensive cross-lane reduce exactly once.
            out_ref[...] = jnp.sum(acc_ref[...], keepdims=True)

    return kernel


@jax.jit
def mae_loss(pred, target):
    assert pred.shape == target.shape, "pred/target shape mismatch"
    n_elems = pred.size

    p = pred.reshape(-1)
    t = target.reshape(-1)

    # View as (rows, 128).  Only pay a zero-pad copy when numel % 128 != 0
    # (the pad contributes |0-0| = 0 to the sum; the mean divides by n_elems).
    rem = n_elems % LANES
    if rem:
        p = jnp.pad(p, (0, LANES - rem))
        t = jnp.pad(t, (0, LANES - rem))
    rows = p.size // LANES
    p2 = p.reshape(rows, LANES)
    t2 = t.reshape(rows, LANES)

    if rows <= MAX_TILE_ROWS:
        # Single grid point (the (2,4,16,16) reference case lands here):
        # full-array blocks in VMEM, no accumulator, no pl.when.
        total = pl.pallas_call(
            _mae_single_block_kernel,
            out_shape=jax.ShapeDtypeStruct((1, 1), jnp.float32),
        )(p2, t2)
    else:
        block_rows = MAX_TILE_ROWS
        num_blocks = pl.cdiv(rows, block_rows)
        # TODO(synk): for very large inputs on v7x, split the grid across the
        # two TensorCores ("parallel" axis) with per-core partial-sum outputs
        # summed in the wrapper instead of one shared "arbitrary" accumulator.
        total = pl.pallas_call(
            _make_tiled_kernel(block_rows, rows),
            out_shape=jax.ShapeDtypeStruct((1, 1), jnp.float32),
            grid=(num_blocks,),
            in_specs=[
                pl.BlockSpec((block_rows, LANES), lambda i: (i, 0)),
                pl.BlockSpec((block_rows, LANES), lambda i: (i, 0)),
            ],
            out_specs=pl.BlockSpec((1, 1), lambda i: (0, 0)),
            scratch_shapes=[pltpu.VMEM((block_rows, LANES), jnp.float32)],
            compiler_params=pltpu.CompilerParams(
                dimension_semantics=("arbitrary",)),
        )(p2, t2)

    # Final scale (glue): sum -> mean over the true element count.
    return (total[0, 0] / jnp.float32(n_elems)).astype(pred.dtype)


if __name__ == "__main__":
    key = jax.random.PRNGKey(0)
    k1, k2 = jax.random.split(key)
    pred = jax.random.normal(k1, (2, 4, 16, 16), dtype=jnp.float32)
    target = jax.random.normal(k2, (2, 4, 16, 16), dtype=jnp.float32)

    out = mae_loss(pred, target)
    out = jax.block_until_ready(out)

    # Reference check (plain JAX).
    ref = jnp.mean(jnp.abs(pred - target))
    assert jnp.allclose(out, ref, atol=1e-6, rtol=1e-6), (out, ref)

    print("KERNEL_OK")
</pallas_src>

<mosaic_0001>
module attributes {stable_mosaic.version = 11 : i64} {
  func.func @_mae_single_block_kernel(%arg0: memref<16x128xf32, #tpu.memory_space<vmem>>, %arg1: memref<16x128xf32, #tpu.memory_space<vmem>>, %arg2: memref<1x1xf32, #tpu.memory_space<vmem>>) attributes {dimension_semantics = [], scalar_prefetch = 0 : i64, scratch_operands = 0 : i64, tpu.core_type = #tpu.core_type<tc>} {
    %c0 = arith.constant 0 : index
    %c0_0 = arith.constant 0 : index
    %0 = vector.load %arg0[%c0, %c0_0] : memref<16x128xf32, #tpu.memory_space<vmem>>, vector<16x128xf32>
    %c0_1 = arith.constant 0 : index
    %c0_2 = arith.constant 0 : index
    %1 = vector.load %arg1[%c0_1, %c0_2] : memref<16x128xf32, #tpu.memory_space<vmem>>, vector<16x128xf32>
    %2 = arith.subf %0, %1 : vector<16x128xf32>
    %3 = math.absf %2 : vector<16x128xf32>
    %4 = vector.shape_cast %3 : vector<16x128xf32> to vector<1x16x128xf32>
    %cst = arith.constant dense<0.000000e+00> : vector<1xf32>
    %5 = vector.multi_reduction <add>, %4, %cst [1, 2] : vector<1x16x128xf32> to vector<1xf32>
    %6 = vector.shape_cast %5 : vector<1xf32> to vector<1x1x1xf32>
    %7 = vector.extract %6[0, 0, 0] : f32 from vector<1x1x1xf32>
    %8 = vector.broadcast %7 : f32 to vector<1x1xf32>
    %c0_3 = arith.constant 0 : index
    %c0_4 = arith.constant 0 : index
    %9 = vector.load %arg2[%c0_3, %c0_4] : memref<1x1xf32, #tpu.memory_space<vmem>>, vector<1x1xf32>
    tpu.vector_store %arg2[%c0_3, %c0_4], %8 {strides = array<i32>} : memref<1x1xf32, #tpu.memory_space<vmem>>, vector<1x1xf32>,
    return
  }
}

</mosaic_0001>

<llo_original>
// kernel: mae_loss.1
$region0: #{mae_loss.1}
  #allocation0 [shape = 'u32[]', space=smem, size = 0x4, offset = 0x4, fixed_abs, tag = 'smem constant byte address 0x4 - core index']
  #allocation1 [shape = 'u32[144,128]{1,0:T(1,128)}', space=vmem, size = 0x12000, scoped, tag = 'internal scratch']
  %s0 = inlined_call_operand.vmem [shape: f32[16,128], index: 0, kind: input, shape index: {}]
  %s1 = inlined_call_operand.vmem [shape: f32[16,128], index: 1, kind: input, shape index: {}]
  %s2 = inlined_call_operand.hbm [shape: f32[1,1], index: 2, kind: output, shape index: {}]
  %s3 = sld [smem:[#allocation0]]
  $region18: #{mae_loss.1} parent=0
    _
  %s5 = ssub.s32 1, %s3
  %s6 = scalar_select 0, %s5, %s3
  $region1: #{mae_loss.1} parent=0
    #allocation2 [shape = 'u8[512]{0}', space=vmem, size = 0x400, scoped, tag = 'output window, operand 0, single buffered']
    #allocation3 [shape = 's32[1]{0}', space=sflag, size = 0x4, scoped, tag = 'scoped memory for mae_loss.1']
    %7 = vsyncpa [#allocation3], 0
    // Predicated region
    $region2: #{mae_loss.1} parent=1 // pred_check
      _
    $region3: #{mae_loss.1} parent=1 // pred_check_branch
      %9 = sbr.rel (0) target = $region5
    $region4: #{mae_loss.1} parent=1 // pred_region
      _
    $region5: #{mae_loss.1} parent=1 // pred_fallthru
      _
    // Predicated region
    $region6: #{mae_loss.1} parent=1 // pred_check
      _
    $region7: #{mae_loss.1} parent=1 // pred_check_branch
      %11 = sbr.rel (0) target = $region9
    $region8: #{mae_loss.1} parent=1 // pred_region
      _
    $region9: #{mae_loss.1} parent=1 // pred_fallthru
      _
    %v12 = vld [vmem:[%s0] sm:$0xff]
    %v13 = vld [vmem:[%s0 + $0x8] sm:$0xff]
    %v14 = vld [vmem:[%s1] sm:$0xff]
    %v15 = vld [vmem:[%s1 + $0x8] sm:$0xff]
    %v16 = vsub.f32 %v12, %v14
    %v17 = vsub.f32 %v13, %v15
    %v18 = vand.u32 2147483647, %v16
    %v19 = vand.u32 2147483647, %v17
    %v20 = vadd.f32 %v18, %v19
    %21 = vadd.xlane.f32.xlu0 %v20
    %v22 = vpop.xlane.xlu0 %21
    %v23 = vrot.slane %v22, 4
    %v24 = vadd.f32 %v22, %v23
    %v25 = vrot.slane %v24, 2
    %v26 = vadd.f32 %v24, %v25
    %v27 = vrot.slane %v26, 1
    %v28 = vadd.f32 %v26, %v27
    %s29 = vtos %v28
    %v30 = vstv %s29
    %vm31 = vcmask 0
    %32 = vst.msk [vmem:[#allocation2] sm:$0x1] %vm31, %v30
    // Predicated region
    $region10: #{mae_loss.1} parent=1 // pred_check
      _
    $region11: #{mae_loss.1} parent=1 // pred_check_branch
      %34 = sbr.rel (0) target = $region13
    $region12: #{mae_loss.1} parent=1 // pred_region
      %s36 = ssub.s32 16, 16
      %37 = vsyncadd [#allocation3], %s36
      %s39 = sshll.u32 [#allocation2], 4
      %s40 = int_to_ptr.vmem [resolvable:$true] %s39
      %42 = dma.vmem_to_hbm [thread:$0]  %s40, 16, %s2, [#allocation3]
    $region13: #{mae_loss.1} parent=1 // pred_fallthru
      _
    // Predicated region
    $region14: #{mae_loss.1} parent=1 // pred_check
      _
    $region15: #{mae_loss.1} parent=1 // pred_check_branch
      %44 = sbr.rel (0) target = $region17
    $region16: #{mae_loss.1} parent=1 // pred_region
      %45 = dma.done [#allocation3], 16
    $region17: #{mae_loss.1} parent=1 // pred_fallthru
      _
    %46 = vsyncpa [#allocation3], 1

</llo_original>
